<compile_context>
chip_gen: v6e
topology: v6e:2x2x1
jax: 0.10.0
libtpu: 0.0.40
codegen_flags: <defaults>
</compile_context>

<pallas_src>
import jax
import jax.numpy as jnp
from jax.experimental import pallas as pl
from jax.experimental.pallas import tpu as pltpu


def _round_up(x, m):
    return (x + m - 1) // m * m


# ----------------------------------------------------------------------------
# Kernel
# ----------------------------------------------------------------------------
def _critic_kernel(s_ref, a_ref, w1s_ref, w1a_ref, b1_ref,
                   w2_ref, b2_ref, w3_ref, b3_ref, out_ref):
    # fc1 in f32 (no concat: [s|a] @ W1 == s @ W1s + a @ W1a).
    h1 = jnp.dot(s_ref[...], w1s_ref[...], preferred_element_type=jnp.float32)
    h1 = h1 + jnp.dot(a_ref[...], w1a_ref[...],
                      preferred_element_type=jnp.float32)
    h1 = jnp.maximum(h1 + b1_ref[...], 0.0)                      # (TB, 256) f32

    cdt = w2_ref.dtype                                           # bf16 compute
    # fc2
    h2 = jnp.dot(h1.astype(cdt), w2_ref[...],
                 preferred_element_type=jnp.float32)
    h2 = jnp.maximum(h2 + b2_ref[...], 0.0)                      # (TB, 256) f32

    # fc3: narrow (256, 1) weight; compact (TB, 1) store (writeback bytes
    # dominate at large B, so a masked 1-lane store beats a padded 128-lane
    # full-width store by ~128x in HBM traffic).
    q = jnp.dot(h2.astype(cdt), w3_ref[...],
                preferred_element_type=jnp.float32)              # (TB, 1)
    out_ref[...] = q + b3_ref[...]


# ----------------------------------------------------------------------------
# Glue
# ----------------------------------------------------------------------------
def prepare_params(params, state_dim, compute_dtype=jnp.bfloat16):
    """One-time pre-processing of PyTorch-style params for the kernel.

    params hold Linear weights already transposed to (in, out) and biases as
    (1, out).  W1 is split at state_dim and kept f32 (fc1 runs in f32);
    fc2/fc3 weights are cast to the compute dtype; biases stay f32.
    """
    w1 = params["w1"].astype(jnp.float32)              # (S+A, 256)
    return dict(
        w1s=w1[:state_dim],                            # (S, 256) f32
        w1a=w1[state_dim:],                            # (A, 256) f32
        b1=params["b1"].astype(jnp.float32),           # (1, 256)
        w2=params["w2"].astype(compute_dtype),         # (256, 256) bf16
        b2=params["b2"].astype(jnp.float32),           # (1, 256)
        w3=params["w3"].astype(compute_dtype),         # (256, 1)  bf16
        b3=params["b3"].astype(jnp.float32),           # (1, 1)
    )


def _choose_tiling(B, block_b):
    """Adaptive batch tiling.

    Returns (tb, b_pad, num_tiles) with tb a multiple of 8, b_pad = tiles*tb,
    >= 2 tiles whenever B >= 256 (v7x megacore + DMA/compute overlap), and
    at most ~7 wasted padded rows per tile.
    """
    min_tiles = 2 if B >= 256 else 1
    num_tiles = max(min_tiles, -(-B // block_b))       # ceil div
    tb = _round_up(-(-B // num_tiles), 8)
    b_pad = _round_up(B, tb)
    return tb, b_pad, b_pad // tb


def critic_forward(state, action, kp, *, block_b=2048):
    """state: (B, S) f32, action: (B, A) f32, kp: prepare_params() output.

    Returns Q values of shape (B, 1), f32 (matches the PyTorch module).
    """
    B, S = state.shape
    A = action.shape[1]

    tb, b_pad, num_tiles = _choose_tiling(B, block_b)
    if b_pad != B:
        pad = ((0, b_pad - B), (0, 0))
        state = jnp.pad(state, pad)
        action = jnp.pad(action, pad)

    def row_spec(n):
        return pl.BlockSpec((tb, n), lambda i: (i, 0))

    def pinned(shape):
        return pl.BlockSpec(shape, lambda i, _n=len(shape): (0,) * _n)

    out = pl.pallas_call(
        _critic_kernel,
        out_shape=jax.ShapeDtypeStruct((b_pad, 1), jnp.float32),
        grid=(num_tiles,),
        in_specs=[
            row_spec(S),                  # state
            row_spec(A),                  # action
            pinned(kp["w1s"].shape), pinned(kp["w1a"].shape), pinned(kp["b1"].shape),
            pinned(kp["w2"].shape), pinned(kp["b2"].shape),
            pinned(kp["w3"].shape), pinned(kp["b3"].shape),
        ],
        out_specs=row_spec(1),            # compact (tb, 1) Q block
        compiler_params=pltpu.CompilerParams(
            dimension_semantics=("parallel",),   # batch tiles -> both TCs on v7x
        ),
    )(state, action, kp["w1s"], kp["w1a"], kp["b1"],
      kp["w2"], kp["b2"], kp["w3"], kp["b3"])

    return out[:B]                        # (B, 1), drop batch padding


# ----------------------------------------------------------------------------
# Init + references
# ----------------------------------------------------------------------------
def init_params(key, state_dim, action_dim):
    """PyTorch-default-like Linear init (U(+-1/sqrt(fan_in))), weights stored
    transposed as (in, out), biases as (1, out), all f32."""
    dims = [(state_dim + action_dim, 256), (256, 256), (256, 1)]
    params = {}
    for i, (fan_in, fan_out) in enumerate(dims, start=1):
        key, kw, kb = jax.random.split(key, 3)
        bound = 1.0 / jnp.sqrt(fan_in)
        params[f"w{i}"] = jax.random.uniform(
            kw, (fan_in, fan_out), jnp.float32, -bound, bound)
        params[f"b{i}"] = jax.random.uniform(
            kb, (1, fan_out), jnp.float32, -bound, bound)
    return params


def critic_ref_f32(state, action, params):
    """Pure-JAX f32 reference (matches the PyTorch module exactly)."""
    x = jnp.concatenate([state, action], axis=1)
    x = jnp.maximum(x @ params["w1"] + params["b1"], 0.0)
    x = jnp.maximum(x @ params["w2"] + params["b2"], 0.0)
    return x @ params["w3"] + params["b3"]


def critic_ref_mixed(state, action, params, compute_dtype=jnp.bfloat16):
    """Pure-JAX reference with the same math as the kernel (f32 fc1,
    bf16-input / f32-accum fc2 & fc3) for a tight numerical check."""
    cdt = compute_dtype
    x = jnp.concatenate([state, action], axis=1)
    h1 = jnp.maximum(x @ params["w1"] + params["b1"], 0.0)
    h2 = jnp.dot(h1.astype(cdt), params["w2"].astype(cdt),
                 preferred_element_type=jnp.float32) + params["b2"]
    h2 = jnp.maximum(h2, 0.0)
    return jnp.dot(h2.astype(cdt), params["w3"].astype(cdt),
                   preferred_element_type=jnp.float32) + params["b3"]


# ----------------------------------------------------------------------------
if __name__ == "__main__":
    STATE_DIM, ACTION_DIM = 17, 6

    key = jax.random.PRNGKey(0)
    kp_key, ks, ka, ks2, ka2 = jax.random.split(key, 5)

    params = init_params(kp_key, STATE_DIM, ACTION_DIM)
    kparams = prepare_params(params, STATE_DIM)

    # --- small batch (single tile) -----------------------------------------
    B = 8
    state = jax.random.normal(ks, (B, STATE_DIM), jnp.float32)
    action = jax.random.normal(ka, (B, ACTION_DIM), jnp.float32)

    q = critic_forward(state, action, kparams)
    q = jax.block_until_ready(q)
    assert q.shape == (B, 1), q.shape

    q_mixed = critic_ref_mixed(state, action, params)
    assert jnp.allclose(q, q_mixed, atol=5e-3, rtol=5e-3), (q, q_mixed)
    q_f32 = critic_ref_f32(state, action, params)
    assert jnp.allclose(q, q_f32, atol=5e-2, rtol=5e-2), (q, q_f32)

    # --- moderate batch (>= 2 tiles + row padding path) ---------------------
    B2 = 260
    state2 = jax.random.normal(ks2, (B2, STATE_DIM), jnp.float32)
    action2 = jax.random.normal(ka2, (B2, ACTION_DIM), jnp.float32)

    q2 = critic_forward(state2, action2, kparams)
    q2 = jax.block_until_ready(q2)
    assert q2.shape == (B2, 1), q2.shape

    q2_mixed = critic_ref_mixed(state2, action2, params)
    assert jnp.allclose(q2, q2_mixed, atol=5e-3, rtol=5e-3)
    q2_f32 = critic_ref_f32(state2, action2, params)
    assert jnp.allclose(q2, q2_f32, atol=5e-2, rtol=5e-2)

    print("KERNEL_OK")
</pallas_src>

<mosaic_0001>
module attributes {stable_mosaic.version = 11 : i64} {
  func.func @_critic_kernel(%arg0: i32, %arg1: memref<8x17xf32, #tpu.memory_space<vmem>>, %arg2: memref<8x6xf32, #tpu.memory_space<vmem>>, %arg3: memref<17x256xf32, #tpu.memory_space<vmem>>, %arg4: memref<6x256xf32, #tpu.memory_space<vmem>>, %arg5: memref<1x256xf32, #tpu.memory_space<vmem>>, %arg6: memref<256x256xbf16, #tpu.memory_space<vmem>>, %arg7: memref<1x256xf32, #tpu.memory_space<vmem>>, %arg8: memref<256x1xbf16, #tpu.memory_space<vmem>>, %arg9: memref<1x1xf32, #tpu.memory_space<vmem>>, %arg10: memref<8x1xf32, #tpu.memory_space<vmem>>) attributes {dimension_semantics = [#tpu.dimension_semantics<parallel>], iteration_bounds = array<i64: 1>, scalar_prefetch = 0 : i64, scratch_operands = 0 : i64, tpu.core_type = #tpu.core_type<tc>, window_params = [{transform_indices = @transform_0, window_bounds = array<i64: 8, 17>}, {transform_indices = @transform_1, window_bounds = array<i64: 8, 6>}, {pipeline_mode = #tpu.pipeline_mode<synchronous>, transform_indices = @transform_2, window_bounds = array<i64: 17, 256>}, {pipeline_mode = #tpu.pipeline_mode<synchronous>, transform_indices = @transform_3, window_bounds = array<i64: 6, 256>}, {pipeline_mode = #tpu.pipeline_mode<synchronous>, transform_indices = @transform_4, window_bounds = array<i64: 1, 256>}, {pipeline_mode = #tpu.pipeline_mode<synchronous>, transform_indices = @transform_5, window_bounds = array<i64: 256, 256>}, {pipeline_mode = #tpu.pipeline_mode<synchronous>, transform_indices = @transform_6, window_bounds = array<i64: 1, 256>}, {pipeline_mode = #tpu.pipeline_mode<synchronous>, transform_indices = @transform_7, window_bounds = array<i64: 256, 1>}, {pipeline_mode = #tpu.pipeline_mode<synchronous>, transform_indices = @transform_8, window_bounds = array<i64: 1, 1>}, {transform_indices = @transform_9, window_bounds = array<i64: 8, 1>}]} {
    %c0 = arith.constant 0 : index
    %c0_0 = arith.constant 0 : index
    %0 = vector.load %arg1[%c0, %c0_0] : memref<8x17xf32, #tpu.memory_space<vmem>>, vector<8x17xf32>
    %c0_1 = arith.constant 0 : index
    %c0_2 = arith.constant 0 : index
    %1 = vector.load %arg3[%c0_1, %c0_2] : memref<17x256xf32, #tpu.memory_space<vmem>>, vector<17x256xf32>
    %cst = arith.constant dense<0.000000e+00> : vector<8x256xf32>
    %2 = tpu.matmul %0, %1, %cst {dimension_numbers = #tpu.dot_dimension_numbers<[1], [0], [0], [1], [0, 0, 1, 1], [], []>} : vector<8x17xf32>, vector<17x256xf32>, vector<8x256xf32> -> vector<8x256xf32>
    %c0_3 = arith.constant 0 : index
    %c0_4 = arith.constant 0 : index
    %3 = vector.load %arg2[%c0_3, %c0_4] : memref<8x6xf32, #tpu.memory_space<vmem>>, vector<8x6xf32>
    %c0_5 = arith.constant 0 : index
    %c0_6 = arith.constant 0 : index
    %4 = vector.load %arg4[%c0_5, %c0_6] : memref<6x256xf32, #tpu.memory_space<vmem>>, vector<6x256xf32>
    %cst_7 = arith.constant dense<0.000000e+00> : vector<8x256xf32>
    %5 = tpu.matmul %3, %4, %cst_7 {dimension_numbers = #tpu.dot_dimension_numbers<[1], [0], [0], [1], [0, 0, 1, 1], [], []>} : vector<8x6xf32>, vector<6x256xf32>, vector<8x256xf32> -> vector<8x256xf32>
    %6 = arith.addf %2, %5 : vector<8x256xf32>
    %c0_8 = arith.constant 0 : index
    %c0_9 = arith.constant 0 : index
    %7 = vector.load %arg5[%c0_8, %c0_9] : memref<1x256xf32, #tpu.memory_space<vmem>>, vector<1x256xf32>
    %8 = vector.broadcast %7 : vector<1x256xf32> to vector<8x256xf32>
    %9 = arith.addf %6, %8 : vector<8x256xf32>
    %cst_10 = arith.constant 0.000000e+00 : f32
    %10 = vector.broadcast %cst_10 : f32 to vector<8x256xf32>
    %11 = arith.maximumf %9, %10 : vector<8x256xf32>
    %12 = arith.truncf %11 : vector<8x256xf32> to vector<8x256xbf16>
    %c0_11 = arith.constant 0 : index
    %c0_12 = arith.constant 0 : index
    %13 = vector.load %arg6[%c0_11, %c0_12] : memref<256x256xbf16, #tpu.memory_space<vmem>>, vector<256x256xbf16>
    %cst_13 = arith.constant dense<0.000000e+00> : vector<8x256xf32>
    %14 = tpu.matmul %12, %13, %cst_13 {dimension_numbers = #tpu.dot_dimension_numbers<[1], [0], [0], [1], [0, 0, 1, 1], [], []>} : vector<8x256xbf16>, vector<256x256xbf16>, vector<8x256xf32> -> vector<8x256xf32>
    %c0_14 = arith.constant 0 : index
    %c0_15 = arith.constant 0 : index
    %15 = vector.load %arg7[%c0_14, %c0_15] : memref<1x256xf32, #tpu.memory_space<vmem>>, vector<1x256xf32>
    %16 = vector.broadcast %15 : vector<1x256xf32> to vector<8x256xf32>
    %17 = arith.addf %14, %16 : vector<8x256xf32>
    %cst_16 = arith.constant 0.000000e+00 : f32
    %18 = vector.broadcast %cst_16 : f32 to vector<8x256xf32>
    %19 = arith.maximumf %17, %18 : vector<8x256xf32>
    %20 = arith.truncf %19 : vector<8x256xf32> to vector<8x256xbf16>
    %c0_17 = arith.constant 0 : index
    %c0_18 = arith.constant 0 : index
    %21 = vector.load %arg8[%c0_17, %c0_18] : memref<256x1xbf16, #tpu.memory_space<vmem>>, vector<256x1xbf16>
    %cst_19 = arith.constant dense<0.000000e+00> : vector<8x1xf32>
    %22 = tpu.matmul %20, %21, %cst_19 {dimension_numbers = #tpu.dot_dimension_numbers<[1], [0], [0], [1], [0, 0, 1, 1], [], []>} : vector<8x256xbf16>, vector<256x1xbf16>, vector<8x1xf32> -> vector<8x1xf32>
    %c0_20 = arith.constant 0 : index
    %c0_21 = arith.constant 0 : index
    %23 = vector.load %arg9[%c0_20, %c0_21] : memref<1x1xf32, #tpu.memory_space<vmem>>, vector<1x1xf32>
    %24 = vector.broadcast %23 : vector<1x1xf32> to vector<8x1xf32>
    %25 = arith.addf %22, %24 : vector<8x1xf32>
    %c0_22 = arith.constant 0 : index
    %c0_23 = arith.constant 0 : index
    %26 = vector.load %arg10[%c0_22, %c0_23] : memref<8x1xf32, #tpu.memory_space<vmem>>, vector<8x1xf32>
    tpu.vector_store %arg10[%c0_22, %c0_23], %25 {strides = array<i32>} : memref<8x1xf32, #tpu.memory_space<vmem>>, vector<8x1xf32>,
    return
  }
  func.func @transform_0(%arg0: i32) -> (i32, i32) {
    %c0_i32 = arith.constant 0 : i32
    %c0_i32_0 = arith.constant 0 : i32
    return %arg0, %c0_i32 : i32, i32
  }
  func.func @transform_1(%arg0: i32) -> (i32, i32) {
    %c0_i32 = arith.constant 0 : i32
    %c0_i32_0 = arith.constant 0 : i32
    return %arg0, %c0_i32 : i32, i32
  }
  func.func @transform_2(%arg0: i32) -> (i32, i32) {
    %c0_i32 = arith.constant 0 : i32
    %c0_i32_0 = arith.constant 0 : i32
    %c0_i32_1 = arith.constant 0 : i32
    return %c0_i32, %c0_i32_0 : i32, i32
  }
  func.func @transform_3(%arg0: i32) -> (i32, i32) {
    %c0_i32 = arith.constant 0 : i32
    %c0_i32_0 = arith.constant 0 : i32
    %c0_i32_1 = arith.constant 0 : i32
    return %c0_i32, %c0_i32_0 : i32, i32
  }
  func.func @transform_4(%arg0: i32) -> (i32, i32) {
    %c0_i32 = arith.constant 0 : i32
    %c0_i32_0 = arith.constant 0 : i32
    %c0_i32_1 = arith.constant 0 : i32
    return %c0_i32, %c0_i32_0 : i32, i32
  }
  func.func @transform_5(%arg0: i32) -> (i32, i32) {
    %c0_i32 = arith.constant 0 : i32
    %c0_i32_0 = arith.constant 0 : i32
    %c0_i32_1 = arith.constant 0 : i32
    return %c0_i32, %c0_i32_0 : i32, i32
  }
  func.func @transform_6(%arg0: i32) -> (i32, i32) {
    %c0_i32 = arith.constant 0 : i32
    %c0_i32_0 = arith.constant 0 : i32
    %c0_i32_1 = arith.constant 0 : i32
    return %c0_i32, %c0_i32_0 : i32, i32
  }
  func.func @transform_7(%arg0: i32) -> (i32, i32) {
    %c0_i32 = arith.constant 0 : i32
    %c0_i32_0 = arith.constant 0 : i32
    %c0_i32_1 = arith.constant 0 : i32
    return %c0_i32, %c0_i32_0 : i32, i32
  }
  func.func @transform_8(%arg0: i32) -> (i32, i32) {
    %c0_i32 = arith.constant 0 : i32
    %c0_i32_0 = arith.constant 0 : i32
    %c0_i32_1 = arith.constant 0 : i32
    return %c0_i32, %c0_i32_0 : i32, i32
  }
  func.func @transform_9(%arg0: i32) -> (i32, i32) {
    %c0_i32 = arith.constant 0 : i32
    %c0_i32_0 = arith.constant 0 : i32
    return %arg0, %c0_i32 : i32, i32
  }
}

</mosaic_0001>

<llo_original>
// kernel: tpu_custom_call.1
$region0: #{tpu_custom_call.1}
  #allocation0 [shape = 'u32[]', space=smem, size = 0x4, offset = 0x4, fixed_abs, tag = 'smem constant byte address 0x4 - core index']
  #allocation1 [shape = 'u32[144,128]{1,0:T(1,128)}', space=vmem, size = 0x12000, scoped, tag = 'internal scratch']
  #allocation2 [shape = 'f32[1,1]{1,0:T(1,128)S(1)}', space=vmem, size = 0x200, scoped, tag = 'scoped memory for tpu_custom_call.1']
  %s0 = inlined_call_operand.vmem [shape: f32[8,17], index: 0, kind: input, shape index: {}]
  %s1 = inlined_call_operand.vmem [shape: f32[8,6], index: 1, kind: input, shape index: {}]
  %s2 = inlined_call_operand.vmem [shape: f32[17,256], index: 2, kind: input, shape index: {}]
  %s3 = inlined_call_operand.vmem [shape: f32[6,256], index: 3, kind: input, shape index: {}]
  %s4 = inlined_call_operand.vmem [shape: f32[1,256], index: 4, kind: input, shape index: {}]
  %s5 = inlined_call_operand.hbm [shape: bf16[256,256], index: 5, kind: input, shape index: {}]
  %s6 = inlined_call_operand.vmem [shape: f32[1,256], index: 6, kind: input, shape index: {}]
  %s7 = inlined_call_operand.vmem [shape: bf16[256,1], index: 7, kind: input, shape index: {}]
  %s8 = inlined_call_operand.<no memory space> [shape: f32[1,1], index: 8, kind: input, shape index: {}]
  %s9 = inlined_call_operand.vmem [shape: f32[8,1], index: 9, kind: output, shape index: {}]
  %s10 = sld [smem:[#allocation0]]
  $region50: #{tpu_custom_call.1} parent=0
    _
  %s12 = ssub.s32 1, %s10
  %s13 = scalar_select 0, %s12, %s10
  %v14 = vstv %s8
  %15 = vst [vmem:[#allocation2] sm:$0x1] %v14
  $region1: #{tpu_custom_call.1} parent=0
    #allocation3 [shape = 'u8[131072]{0}', space=vmem, size = 0x20000, scoped, tag = 'input window, operand 5, single buffered']
    #allocation4 [shape = 's32[1]{0}', space=sflag, size = 0x4, scoped, tag = 'scoped memory for tpu_custom_call.1']
    %16 = vsyncpa [#allocation4], 0
    // Predicated region
    $region2: #{tpu_custom_call.1} parent=1 // pred_check
      _
    $region3: #{tpu_custom_call.1} parent=1 // pred_check_branch
      %18 = sbr.rel (0) target = $region5
    $region4: #{tpu_custom_call.1} parent=1 // pred_region
      _
    $region5: #{tpu_custom_call.1} parent=1 // pred_fallthru
      _
    // Predicated region
    $region6: #{tpu_custom_call.1} parent=1 // pred_check
      _
    $region7: #{tpu_custom_call.1} parent=1 // pred_check_branch
      %20 = sbr.rel (0) target = $region9
    $region8: #{tpu_custom_call.1} parent=1 // pred_region
      _
    $region9: #{tpu_custom_call.1} parent=1 // pred_fallthru
      _
    // Predicated region
    $region10: #{tpu_custom_call.1} parent=1 // pred_check
      _
    $region11: #{tpu_custom_call.1} parent=1 // pred_check_branch
      %22 = sbr.rel (0) target = $region13
    $region12: #{tpu_custom_call.1} parent=1 // pred_region
      _
    $region13: #{tpu_custom_call.1} parent=1 // pred_fallthru
      _
    // Predicated region
    $region14: #{tpu_custom_call.1} parent=1 // pred_check
      _
    $region15: #{tpu_custom_call.1} parent=1 // pred_check_branch
      %24 = sbr.rel (0) target = $region17
    $region16: #{tpu_custom_call.1} parent=1 // pred_region
      _
    $region17: #{tpu_custom_call.1} parent=1 // pred_fallthru
      _
    // Predicated region
    $region18: #{tpu_custom_call.1} parent=1 // pred_check
      _
    $region19: #{tpu_custom_call.1} parent=1 // pred_check_branch
      %26 = sbr.rel (0) target = $region21
    $region20: #{tpu_custom_call.1} parent=1 // pred_region
      _
    $region21: #{tpu_custom_call.1} parent=1 // pred_fallthru
      _
    // Predicated region
    $region22: #{tpu_custom_call.1} parent=1 // pred_check
      _
    $region23: #{tpu_custom_call.1} parent=1 // pred_check_branch
      %28 = sbr.rel (0) target = $region25
    $region24: #{tpu_custom_call.1} parent=1 // pred_region
      %s30 = ssub.s32 4096, 4096
      %31 = vsyncadd [#allocation4], %s30
      %s32 = sshll.u32 [#allocation3], 4
      %s33 = int_to_ptr.vmem [resolvable:$true] %s32
      %38 = dma.hbm_to_vmem [thread:$0]  %s5, 4096, %s33, [#allocation4], 128, 128, 8
    $region25: #{tpu_custom_call.1} parent=1 // pred_fallthru
      _
    // Predicated region
    $region26: #{tpu_custom_call.1} parent=1 // pred_check
      _
    $region27: #{tpu_custom_call.1} parent=1 // pred_check_branch
      %40 = sbr.rel (0) target = $region29
    $region28: #{tpu_custom_call.1} parent=1 // pred_region
      _
    $region29: #{tpu_custom_call.1} parent=1 // pred_fallthru
      _
    // Predicated region
    $region30: #{tpu_custom_call.1} parent=1 // pred_check
      _
    $region31: #{tpu_custom_call.1} parent=1 // pred_check_branch
      %42 = sbr.rel (0) target = $region33
    $region32: #{tpu_custom_call.1} parent=1 // pred_region
      _
    $region33: #{tpu_custom_call.1} parent=1 // pred_fallthru
      _
    // Predicated region
    $region34: #{tpu_custom_call.1} parent=1 // pred_check
      _
    $region35: #{tpu_custom_call.1} parent=1 // pred_check_branch
      %44 = sbr.rel (0) target = $region37
    $region36: #{tpu_custom_call.1} parent=1 // pred_region
      _
    $region37: #{tpu_custom_call.1} parent=1 // pred_fallthru
      _
    // Predicated region
    $region38: #{tpu_custom_call.1} parent=1 // pred_check
      _
    $region39: #{tpu_custom_call.1} parent=1 // pred_check_branch
      %46 = sbr.rel (0) target = $region41
    $region40: #{tpu_custom_call.1} parent=1 // pred_region
      %47 = dma.done [#allocation4], 4096
    $region41: #{tpu_custom_call.1} parent=1 // pred_fallthru
      _
    %v49 = vld [vmem:[%s0] sm:$0xff]
    %v50 = vld [vmem:[%s2] sm:$0xff]
    %v51 = vld [vmem:[%s2 + $0x8] sm:$0xff]
    %v52 = vld [vmem:[%s2 + $0x10] sm:$0xff]
    %v53 = vld [vmem:[%s2 + $0x18] sm:$0xff]
    %v54 = vld [vmem:[%s2 + $0x20] sm:$0x1]
    %v55 = vld [vmem:[%s2 + $0x28] sm:$0x1]
    %v56 = vld [vmem:[%s1] sm:$0xff]
    %v57 = vld [vmem:[%s3] sm:$0x3f]
    %v58 = vld [vmem:[%s3 + $0x8] sm:$0x3f]
    %vm59 = vcmask 48128
    %v61 = vsel %vm59, %v56, 0
    %vm63 = vcmask 1045504
    %v65 = vsel %vm63, %v57, 0
    %v68 = vsel %vm63, %v58, 0
    %70 = vmatprep.subr.mxu0 0.0
    %71 = vmatpush1.msra.mxu0 0.0
    %72 = vmatprep.subr.mxu0 0.0
    %73 = vmatpush1.msra.mxu0 0.0
    %74 = vmatprep.subr.mxu0 0.0
    %75 = vmatpush1.msra.mxu0 0.0
    %76 = vmatprep.subr.mxu0 0.0
    %77 = vmatpush1.msra.mxu0 0.0
    %78 = vmatprep.subr.mxu0 0.0
    %79 = vmatpush1.msra.mxu0 0.0
    %80 = vmatprep.subr.mxu0 0.0
    %81 = vmatpush1.msra.mxu0 0.0
    %82 = vmatprep.subr.mxu0 0.0
    %83 = vmatpush1.msra.mxu0 0.0
    %84 = vmatprep.subr.mxu0 0.0
    %85 = vmatpush1.msra.mxu0 0.0
    %86 = vmatprep.subr.mxu0 0.0
    %87 = vmatpush1.msra.mxu0 0.0
    %88 = vmatprep.subr.mxu0 0.0
    %89 = vmatpush1.msra.mxu0 0.0
    %90 = vmatprep.subr.mxu0 0.0
    %91 = vmatpush1.msra.mxu0 0.0
    %92 = vmatprep.subr.mxu0 0.0
    %93 = vmatpush1.msra.mxu0 0.0
    %94 = vmatprep.subr.mxu0 0.0
    %95 = vmatpush1.msra.mxu0 0.0
    %96 = vmatprep.subr.mxu0 0.0
    %97 = vmatpush1.msra.mxu0 0.0
    %98 = vmatprep.subr.mxu0 0.0
    %99 = vmatpush1.msra.mxu0 0.0
    %100 = vmatprep.subr.mxu0 %v68
    %101 = vmatpush1.msra.mxu0 %v65
    %102 = vmatprep.subr.mxu0 0.0
    %103 = vmatpush2.msra.mxu0 0.0
    %104 = vmatprep.subr.mxu0 0.0
    %105 = vmatpush2.msra.mxu0 0.0
    %106 = vmatprep.subr.mxu0 0.0
    %107 = vmatpush2.msra.mxu0 0.0
    %108 = vmatprep.subr.mxu0 0.0
    %109 = vmatpush2.msra.mxu0 0.0
    %110 = vmatprep.subr.mxu0 0.0
    %111 = vmatpush2.msra.mxu0 0.0
    %112 = vmatprep.subr.mxu0 0.0
    %113 = vmatpush2.msra.mxu0 0.0
    %114 = vmatprep.subr.mxu0 0.0
    %115 = vmatpush2.msra.mxu0 0.0
    %116 = vmatprep.subr.mxu0 0.0
    %117 = vmatpush2.msra.mxu0 0.0
    %118 = vmatprep.subr.mxu0 0.0
    %119 = vmatpush2.msra.mxu0 0.0
    %120 = vmatprep.subr.mxu0 0.0
    %121 = vmatpush2.msra.mxu0 0.0
    %122 = vmatprep.subr.mxu0 0.0
    %123 = vmatpush2.msra.mxu0 0.0
    %124 = vmatprep.subr.mxu0 0.0
    %125 = vmatpush2.msra.mxu0 0.0
    %126 = vmatprep.subr.mxu0 0.0
    %127 = vmatpush2.msra.mxu0 0.0
    %128 = vmatprep.subr.mxu0 0.0
    %129 = vmatpush2.msra.mxu0 0.0
    %130 = vmatprep.subr.mxu0 0.0
    %131 = vmatpush2.msra.mxu0 0.0
    %132 = vmatprep.subr.mxu0 0.0
    %133 = vmatpush2.msra.mxu0 0.0
    %134 = vmatprep.mubr.f32.mxu0 0.0
    %135 = vmatmul.mubr.f32.gmra.mxu0 %v61
    %v136 = vpop.f32.mrf.mxu0
    %v137 = vadd.f32 0.0, %v136
    %v138 = vpop.f32.mrf.mxu0
    %v139 = vadd.f32 0.0, %v138
    %140 = vdwg.mxu0
    %vm141 = vcmask 138240
    %v143 = vsel %vm141, %v49, 0
    %vm145 = vcmask 1040384
    %v147 = vsel %vm145, %v54, 0
    %v150 = vsel %vm145, %v55, 0
    %152 = vmatprep.subr.mxu0 0.0
    %153 = vmatpush1.msra.mxu0 0.0
    %154 = vmatprep.subr.mxu0 0.0
    %155 = vmatpush1.msra.mxu0 0.0
    %156 = vmatprep.subr.mxu0 0.0
    %157 = vmatpush1.msra.mxu0 0.0
    %158 = vmatprep.subr.mxu0 0.0
    %159 = vmatpush1.msra.mxu0 0.0
    %160 = vmatprep.subr.mxu0 0.0
    %161 = vmatpush1.msra.mxu0 0.0
    %162 = vmatprep.subr.mxu0 0.0
    %163 = vmatpush1.msra.mxu0 0.0
    %164 = vmatprep.subr.mxu0 0.0
    %165 = vmatpush1.msra.mxu0 0.0
    %166 = vmatprep.subr.mxu0 0.0
    %167 = vmatpush1.msra.mxu0 0.0
    %168 = vmatprep.subr.mxu0 0.0
    %169 = vmatpush1.msra.mxu0 0.0
    %170 = vmatprep.subr.mxu0 0.0
    %171 = vmatpush1.msra.mxu0 0.0
    %172 = vmatprep.subr.mxu0 0.0
    %173 = vmatpush1.msra.mxu0 0.0
    %174 = vmatprep.subr.mxu0 0.0
    %175 = vmatpush1.msra.mxu0 0.0
    %176 = vmatprep.subr.mxu0 0.0
    %177 = vmatpush1.msra.mxu0 0.0
    %178 = vmatprep.subr.mxu0 %v150
    %179 = vmatpush1.msra.mxu0 %v147
    %180 = vmatprep.subr.mxu0 %v53
    %181 = vmatpush1.msra.mxu0 %v52
    %182 = vmatprep.subr.mxu0 %v51
    %183 = vmatpush1.msra.mxu0 %v50
    %184 = vmatprep.subr.mxu0 0.0
    %185 = vmatpush2.msra.mxu0 0.0
    %186 = vmatprep.subr.mxu0 0.0
    %187 = vmatpush2.msra.mxu0 0.0
    %188 = vmatprep.subr.mxu0 0.0
    %189 = vmatpush2.msra.mxu0 0.0
    %190 = vmatprep.subr.mxu0 0.0
    %191 = vmatpush2.msra.mxu0 0.0
    %192 = vmatprep.subr.mxu0 0.0
    %193 = vmatpush2.msra.mxu0 0.0
    %194 = vmatprep.subr.mxu0 0.0
    %195 = vmatpush2.msra.mxu0 0.0
    %196 = vmatprep.subr.mxu0 0.0
    %197 = vmatpush2.msra.mxu0 0.0
    %198 = vmatprep.subr.mxu0 0.0
    %199 = vmatpush2.msra.mxu0 0.0
    %200 = vmatprep.subr.mxu0 0.0
    %201 = vmatpush2.msra.mxu0 0.0
    %202 = vmatprep.subr.mxu0 0.0
    %203 = vmatpush2.msra.mxu0 0.0
    %204 = vmatprep.subr.mxu0 0.0
    %205 = vmatpush2.msra.mxu0 0.0
    %206 = vmatprep.subr.mxu0 0.0
    %207 = vmatpush2.msra.mxu0 0.0
    %208 = vmatprep.subr.mxu0 0.0
    %209 = vmatpush2.msra.mxu0 0.0
    %210 = vmatprep.subr.mxu0 0.0
    %211 = vmatpush2.msra.mxu0 0.0
    %212 = vmatprep.subr.mxu0 0.0
    %213 = vmatpush2.msra.mxu0 0.0
    %214 = vmatprep.subr.mxu0 0.0
    %215 = vmatpush2.msra.mxu0 0.0
    %216 = vmatprep.mubr.f32.mxu0 0.0
    %217 = vmatmul.mubr.f32.gmra.mxu0 %v143
    %v218 = vpop.f32.mrf.mxu0
    %v219 = vadd.f32 %v137, %v218
    %v220 = vpop.f32.mrf.mxu0
    %v221 = vadd.f32 %v139, %v220
    %222 = vdwg.mxu0
    %v223 = vld [vmem:[%s4] sm:$0x3]
    %v225 = vlaneseq
    %v226 = vshrl.u32 %v225, 7
    %v227 = vsub.s32 0, %v226
    %v228 = vrot.slane %v223, %v227
    %v229 = vlaneseq
    %v230 = vshrl.u32 %v229, 7
    %v231 = vsub.s32 1, %v230
    %v232 = vrot.slane %v223, %v231
    %v235 = vadd.f32 %v219, %v228
    %v236 = vadd.f32 %v221, %v232
    %v237 = vmax.f32 %v235, 0.0
    %v238 = vmax.f32 %v236, 0.0
    %v239 = vpack.c.bf16 %v237, %v237
    %v240 = vpack.c.bf16 %v238, %v238
    %v241 = vld [vmem:[#allocation3] sm:$0xff]
    %v242 = vld [vmem:[#allocation3 + $0x8] sm:$0xff]
    %v243 = vld [vmem:[#allocation3 + $0x10] sm:$0xff]
    %v244 = vld [vmem:[#allocation3 + $0x18] sm:$0xff]
    %v245 = vld [vmem:[#allocation3 + $0x20] sm:$0xff]
    %v246 = vld [vmem:[#allocation3 + $0x28] sm:$0xff]
    %v247 = vld [vmem:[#allocation3 + $0x30] sm:$0xff]
    %v248 = vld [vmem:[#allocation3 + $0x38] sm:$0xff]
    %v249 = vld [vmem:[#allocation3 + $0x40] sm:$0xff]
    %v250 = vld [vmem:[#allocation3 + $0x48] sm:$0xff]
    %v251 = vld [vmem:[#allocation3 + $0x50] sm:$0xff]
    %v252 = vld [vmem:[#allocation3 + $0x58] sm:$0xff]
    %v253 = vld [vmem:[#allocation3 + $0x60] sm:$0xff]
    %v254 = vld [vmem:[#allocation3 + $0x68] sm:$0xff]
    %v255 = vld [vmem:[#allocation3 + $0x70] sm:$0xff]
    %v256 = vld [vmem:[#allocation3 + $0x78] sm:$0xff]
    %v257 = vld [vmem:[#allocation3 + $0x80] sm:$0xff]
    %v258 = vld [vmem:[#allocation3 + $0x88] sm:$0xff]
    %v259 = vld [vmem:[#allocation3 + $0x90] sm:$0xff]
    %v260 = vld [vmem:[#allocation3 + $0x98] sm:$0xff]
    %v261 = vld [vmem:[#allocation3 + $0xa0] sm:$0xff]
    %v262 = vld [vmem:[#allocation3 + $0xa8] sm:$0xff]
    %v263 = vld [vmem:[#allocation3 + $0xb0] sm:$0xff]
    %v264 = vld [vmem:[#allocation3 + $0xb8] sm:$0xff]
    %v265 = vld [vmem:[#allocation3 + $0xc0] sm:$0xff]
    %v266 = vld [vmem:[#allocation3 + $0xc8] sm:$0xff]
    %v267 = vld [vmem:[#allocation3 + $0xd0] sm:$0xff]
    %v268 = vld [vmem:[#allocation3 + $0xd8] sm:$0xff]
    %v269 = vld [vmem:[#allocation3 + $0xe0] sm:$0xff]
    %v270 = vld [vmem:[#allocation3 + $0xe8] sm:$0xff]
    %v271 = vld [vmem:[#allocation3 + $0xf0] sm:$0xff]
    %v272 = vld [vmem:[#allocation3 + $0xf8] sm:$0xff]
    %v273 = vld [vmem:[%s6] sm:$0x3]
    %v275 = vlaneseq
    %v276 = vshrl.u32 %v275, 7
    %v277 = vsub.s32 0, %v276
    %v278 = vrot.slane %v273, %v277
    %v279 = vlaneseq
    %v280 = vshrl.u32 %v279, 7
    %v281 = vsub.s32 1, %v280
    %v282 = vrot.slane %v273, %v281
    %v317 = vunpack.c.l.b16 %v241
    %v318 = vunpack.c.h.b16 %v241
    %v319 = vunpack.c.l.b16 %v242
    %v320 = vunpack.c.h.b16 %v242
    %v321 = vunpack.c.l.b16 %v243
    %v322 = vunpack.c.h.b16 %v243
    %v323 = vunpack.c.l.b16 %v244
    %v324 = vunpack.c.h.b16 %v244
    %v325 = vunpack.c.l.b16 %v245
    %v326 = vunpack.c.h.b16 %v245
    %v327 = vunpack.c.l.b16 %v246
    %v328 = vunpack.c.h.b16 %v246
    %v329 = vunpack.c.l.b16 %v247
    %v330 = vunpack.c.h.b16 %v247
    %v331 = vunpack.c.l.b16 %v248
    %v332 = vunpack.c.h.b16 %v248
    %v333 = vunpack.c.l.b16 %v249
    %v334 = vunpack.c.h.b16 %v249
    %v335 = vunpack.c.l.b16 %v250
    %v336 = vunpack.c.h.b16 %v250
    %v337 = vunpack.c.l.b16 %v251
    %v338 = vunpack.c.h.b16 %v251
    %v339 = vunpack.c.l.b16 %v252
    %v340 = vunpack.c.h.b16 %v252
    %v341 = vunpack.c.l.b16 %v253
    %v342 = vunpack.c.h.b16 %v253
    %v343 = vunpack.c.l.b16 %v254
    %v344 = vunpack.c.h.b16 %v254
    %v345 = vunpack.c.l.b16 %v255
    %v346 = vunpack.c.h.b16 %v255
    %v347 = vunpack.c.l.b16 %v256
    %v348 = vunpack.c.h.b16 %v256
    %v349 = vunpack.c.l.b16 %v257
    %v350 = vunpack.c.h.b16 %v257
    %v351 = vunpack.c.l.b16 %v258
    %v352 = vunpack.c.h.b16 %v258
    %v353 = vunpack.c.l.b16 %v259
    %v354 = vunpack.c.h.b16 %v259
    %v355 = vunpack.c.l.b16 %v260
    %v356 = vunpack.c.h.b16 %v260
    %v357 = vunpack.c.l.b16 %v261
    %v358 = vunpack.c.h.b16 %v261
    %v359 = vunpack.c.l.b16 %v262
    %v360 = vunpack.c.h.b16 %v262
    %v361 = vunpack.c.l.b16 %v263
    %v362 = vunpack.c.h.b16 %v263
    %v363 = vunpack.c.l.b16 %v264
    %v364 = vunpack.c.h.b16 %v264
    %v365 = vunpack.c.l.b16 %v265
    %v366 = vunpack.c.h.b16 %v265
    %v367 = vunpack.c.l.b16 %v266
    %v368 = vunpack.c.h.b16 %v266
    %v369 = vunpack.c.l.b16 %v267
    %v370 = vunpack.c.h.b16 %v267
    %v371 = vunpack.c.l.b16 %v268
    %v372 = vunpack.c.h.b16 %v268
    %v373 = vunpack.c.l.b16 %v269
    %v374 = vunpack.c.h.b16 %v269
    %v375 = vunpack.c.l.b16 %v270
    %v376 = vunpack.c.h.b16 %v270
    %v377 = vunpack.c.l.b16 %v271
    %v378 = vunpack.c.h.b16 %v271
    %v379 = vunpack.c.l.b16 %v272
    %v380 = vunpack.c.h.b16 %v272
    %v381 = vpack.c.b16 %v319, %v317
    %v382 = vpack.c.b16 %v320, %v318
    %v383 = vpack.c.b16 %v323, %v321
    %v384 = vpack.c.b16 %v324, %v322
    %v385 = vpack.c.b16 %v327, %v325
    %v386 = vpack.c.b16 %v328, %v326
    %v387 = vpack.c.b16 %v331, %v329
    %v388 = vpack.c.b16 %v332, %v330
    %v389 = vpack.c.b16 %v335, %v333
    %v390 = vpack.c.b16 %v336, %v334
    %v391 = vpack.c.b16 %v339, %v337
    %v392 = vpack.c.b16 %v340, %v338
    %v393 = vpack.c.b16 %v343, %v341
    %v394 = vpack.c.b16 %v344, %v342
    %v395 = vpack.c.b16 %v347, %v345
    %v396 = vpack.c.b16 %v348, %v346
    %v397 = vpack.c.b16 %v351, %v349
    %v398 = vpack.c.b16 %v352, %v350
    %v399 = vpack.c.b16 %v355, %v353
    %v400 = vpack.c.b16 %v356, %v354
    %v401 = vpack.c.b16 %v359, %v357
    %v402 = vpack.c.b16 %v360, %v358
    %v403 = vpack.c.b16 %v363, %v361
    %v404 = vpack.c.b16 %v364, %v362
    %v405 = vpack.c.b16 %v367, %v365
    %v406 = vpack.c.b16 %v368, %v366
    %v407 = vpack.c.b16 %v371, %v369
    %v408 = vpack.c.b16 %v372, %v370
    %v409 = vpack.c.b16 %v375, %v373
    %v410 = vpack.c.b16 %v376, %v374
    %v411 = vpack.c.b16 %v379, %v377
    %v412 = vpack.c.b16 %v380, %v378
    %445 = vmatprep.subr.bf16.mxu0 %v396
    %446 = vmatpush1.bf16.msra.mxu0 %v395
    %447 = vmatprep.subr.bf16.mxu0 %v394
    %448 = vmatpush1.bf16.msra.mxu0 %v393
    %449 = vmatprep.subr.bf16.mxu0 %v392
    %450 = vmatpush1.bf16.msra.mxu0 %v391
    %451 = vmatprep.subr.bf16.mxu0 %v390
    %452 = vmatpush1.bf16.msra.mxu0 %v389
    %453 = vmatprep.subr.bf16.mxu0 %v388
    %454 = vmatpush1.bf16.msra.mxu0 %v387
    %455 = vmatprep.subr.bf16.mxu0 %v386
    %456 = vmatpush1.bf16.msra.mxu0 %v385
    %457 = vmatprep.subr.bf16.mxu0 %v384
    %458 = vmatpush1.bf16.msra.mxu0 %v383
    %459 = vmatprep.subr.bf16.mxu0 %v382
    %460 = vmatpush1.bf16.msra.mxu0 %v381
    %461 = vmatprep.subr.bf16.mxu0 %v412
    %462 = vmatpush2.bf16.msra.mxu0 %v411
    %463 = vmatprep.subr.bf16.mxu0 %v410
    %464 = vmatpush2.bf16.msra.mxu0 %v409
    %465 = vmatprep.subr.bf16.mxu0 %v408
    %466 = vmatpush2.bf16.msra.mxu0 %v407
    %467 = vmatprep.subr.bf16.mxu0 %v406
    %468 = vmatpush2.bf16.msra.mxu0 %v405
    %469 = vmatprep.subr.bf16.mxu0 %v404
    %470 = vmatpush2.bf16.msra.mxu0 %v403
    %471 = vmatprep.subr.bf16.mxu0 %v402
    %472 = vmatpush2.bf16.msra.mxu0 %v401
    %473 = vmatprep.subr.bf16.mxu0 %v400
    %474 = vmatpush2.bf16.msra.mxu0 %v399
    %475 = vmatprep.subr.bf16.mxu0 %v398
    %476 = vmatpush2.bf16.msra.mxu0 %v397
    %477 = vmatprep.mubr.bf16.mxu0 %v240
    %478 = vmatmul.mubr.bf16.gmra.mxu0 %v239
    %v479 = vpop.f32.mrf.mxu0
    %v480 = vadd.f32 %v278, %v479
    %v481 = vpop.f32.mrf.mxu0
    %v482 = vadd.f32 %v282, %v481
    %v483 = vpop.f32.mrf.mxu0
    %v484 = vpop.f32.mrf.mxu0
    %485 = vdwg.mxu0
    %v486 = vmax.f32 %v480, 0.0
    %v487 = vmax.f32 %v482, 0.0
    %v488 = vpack.c.bf16 %v486, %v486
    %v489 = vpack.c.bf16 %v487, %v487
    %v490 = vld [vmem:[%s7] sm:$0xf]
    %v491 = vld [vmem:[%s7 + $0x4] sm:$0xf]
    %v492 = vld [vmem:[%s7 + $0x8] sm:$0xf]
    %v493 = vld [vmem:[%s7 + $0xc] sm:$0xf]
    %v494 = vld [vmem:[%s7 + $0x10] sm:$0xf]
    %v495 = vld [vmem:[%s7 + $0x14] sm:$0xf]
    %v496 = vld [vmem:[%s7 + $0x18] sm:$0xf]
    %v497 = vld [vmem:[%s7 + $0x1c] sm:$0xf]
    %v498 = vld [vmem:[%s7 + $0x20] sm:$0xf]
    %v499 = vld [vmem:[%s7 + $0x24] sm:$0xf]
    %v500 = vld [vmem:[%s7 + $0x28] sm:$0xf]
    %v501 = vld [vmem:[%s7 + $0x2c] sm:$0xf]
    %v502 = vld [vmem:[%s7 + $0x30] sm:$0xf]
    %v503 = vld [vmem:[%s7 + $0x34] sm:$0xf]
    %v504 = vld [vmem:[%s7 + $0x38] sm:$0xf]
    %v505 = vld [vmem:[%s7 + $0x3c] sm:$0xf]
    %v506 = vld [vmem:[%s7 + $0x40] sm:$0xf]
    %v507 = vld [vmem:[%s7 + $0x44] sm:$0xf]
    %v508 = vld [vmem:[%s7 + $0x48] sm:$0xf]
    %v509 = vld [vmem:[%s7 + $0x4c] sm:$0xf]
    %v510 = vld [vmem:[%s7 + $0x50] sm:$0xf]
    %v511 = vld [vmem:[%s7 + $0x54] sm:$0xf]
    %v512 = vld [vmem:[%s7 + $0x58] sm:$0xf]
    %v513 = vld [vmem:[%s7 + $0x5c] sm:$0xf]
    %v514 = vld [vmem:[%s7 + $0x60] sm:$0xf]
    %v515 = vld [vmem:[%s7 + $0x64] sm:$0xf]
    %v516 = vld [vmem:[%s7 + $0x68] sm:$0xf]
    %v517 = vld [vmem:[%s7 + $0x6c] sm:$0xf]
    %v518 = vld [vmem:[%s7 + $0x70] sm:$0xf]
    %v519 = vld [vmem:[%s7 + $0x74] sm:$0xf]
    %v520 = vld [vmem:[%s7 + $0x78] sm:$0xf]
    %v521 = vld [vmem:[%s7 + $0x7c] sm:$0xf]
    %v522 = vld [vmem:[#allocation2] sm:$0x1]
    %v524 = vlaneseq
    %v525 = vshrl.u32 %v524, 7
    %v526 = vsub.s32 0, %v525
    %v527 = vrot.slane %v522, %v526
    %v561 = vunpack.c.l.b16 %v490
    %v562 = vunpack.c.l.b16 %v491
    %v563 = vunpack.c.l.b16 %v492
    %v564 = vunpack.c.l.b16 %v493
    %v565 = vunpack.c.l.b16 %v494
    %v566 = vunpack.c.l.b16 %v495
    %v567 = vunpack.c.l.b16 %v496
    %v568 = vunpack.c.l.b16 %v497
    %v569 = vunpack.c.l.b16 %v498
    %v570 = vunpack.c.l.b16 %v499
    %v571 = vunpack.c.l.b16 %v500
    %v572 = vunpack.c.l.b16 %v501
    %v573 = vunpack.c.l.b16 %v502
    %v574 = vunpack.c.l.b16 %v503
    %v575 = vunpack.c.l.b16 %v504
    %v576 = vunpack.c.l.b16 %v505
    %v577 = vunpack.c.l.b16 %v506
    %v578 = vunpack.c.l.b16 %v507
    %v579 = vunpack.c.l.b16 %v508
    %v580 = vunpack.c.l.b16 %v509
    %v581 = vunpack.c.l.b16 %v510
    %v582 = vunpack.c.l.b16 %v511
    %v583 = vunpack.c.l.b16 %v512
    %v584 = vunpack.c.l.b16 %v513
    %v585 = vunpack.c.l.b16 %v514
    %v586 = vunpack.c.l.b16 %v515
    %v587 = vunpack.c.l.b16 %v516
    %v588 = vunpack.c.l.b16 %v517
    %v589 = vunpack.c.l.b16 %v518
    %v590 = vunpack.c.l.b16 %v519
    %v591 = vunpack.c.l.b16 %v520
    %v592 = vunpack.c.l.b16 %v521
    %v593 = vpack.c.b16 %v562, %v561
    %v594 = vpack.c.b16 %v564, %v563
    %v595 = vpack.c.b16 %v566, %v565
    %v596 = vpack.c.b16 %v568, %v567
    %v597 = vpack.c.b16 %v570, %v569
    %v598 = vpack.c.b16 %v572, %v571
    %v599 = vpack.c.b16 %v574, %v573
    %v600 = vpack.c.b16 %v576, %v575
    %v601 = vpack.c.b16 %v578, %v577
    %v602 = vpack.c.b16 %v580, %v579
    %v603 = vpack.c.b16 %v582, %v581
    %v604 = vpack.c.b16 %v584, %v583
    %v605 = vpack.c.b16 %v586, %v585
    %v606 = vpack.c.b16 %v588, %v587
    %v607 = vpack.c.b16 %v590, %v589
    %v608 = vpack.c.b16 %v592, %v591
    %625 = vmatprep.subr.bf16.mxu0 0
    %626 = vmatpush1.bf16.msra.mxu0 %v600
    %627 = vmatprep.subr.bf16.mxu0 0
    %628 = vmatpush1.bf16.msra.mxu0 %v599
    %629 = vmatprep.subr.bf16.mxu0 0
    %630 = vmatpush1.bf16.msra.mxu0 %v598
    %631 = vmatprep.subr.bf16.mxu0 0
    %632 = vmatpush1.bf16.msra.mxu0 %v597
    %633 = vmatprep.subr.bf16.mxu0 0
    %634 = vmatpush1.bf16.msra.mxu0 %v596
    %635 = vmatprep.subr.bf16.mxu0 0
    %636 = vmatpush1.bf16.msra.mxu0 %v595
    %637 = vmatprep.subr.bf16.mxu0 0
    %638 = vmatpush1.bf16.msra.mxu0 %v594
    %639 = vmatprep.subr.bf16.mxu0 0
    %640 = vmatpush1.bf16.msra.mxu0 %v593
    %641 = vmatprep.subr.bf16.mxu0 0
    %642 = vmatpush2.bf16.msra.mxu0 %v608
    %643 = vmatprep.subr.bf16.mxu0 0
    %644 = vmatpush2.bf16.msra.mxu0 %v607
    %645 = vmatprep.subr.bf16.mxu0 0
    %646 = vmatpush2.bf16.msra.mxu0 %v606
    %647 = vmatprep.subr.bf16.mxu0 0
    %648 = vmatpush2.bf16.msra.mxu0 %v605
    %649 = vmatprep.subr.bf16.mxu0 0
    %650 = vmatpush2.bf16.msra.mxu0 %v604
    %651 = vmatprep.subr.bf16.mxu0 0
    %652 = vmatpush2.bf16.msra.mxu0 %v603
    %653 = vmatprep.subr.bf16.mxu0 0
    %654 = vmatpush2.bf16.msra.mxu0 %v602
    %655 = vmatprep.subr.bf16.mxu0 0
    %656 = vmatpush2.bf16.msra.mxu0 %v601
    %657 = vmatprep.mubr.bf16.mxu0 %v489
    %658 = vmatmul.mubr.bf16.gmra.mxu0 %v488
    %v659 = vpop.f32.mrf.mxu0
    %v660 = vadd.f32 %v527, %v659
    %v661 = vpop.f32.mrf.mxu0
    %v662 = vpop.f32.mrf.mxu0
    %v663 = vpop.f32.mrf.mxu0
    %664 = vdwg.mxu0
    %vm665 = vcmask 7168
    %666 = vst.msk [vmem:[%s9] sm:$0xff] %vm665, %v660
    // Predicated region
    $region42: #{tpu_custom_call.1} parent=1 // pred_check
      _
    $region43: #{tpu_custom_call.1} parent=1 // pred_check_branch
      %668 = sbr.rel (0) target = $region45
    $region44: #{tpu_custom_call.1} parent=1 // pred_region
      _
    $region45: #{tpu_custom_call.1} parent=1 // pred_fallthru
      _
    // Predicated region
    $region46: #{tpu_custom_call.1} parent=1 // pred_check
      _
    $region47: #{tpu_custom_call.1} parent=1 // pred_check_branch
      %670 = sbr.rel (0) target = $region49
    $region48: #{tpu_custom_call.1} parent=1 // pred_region
      _
    $region49: #{tpu_custom_call.1} parent=1 // pred_fallthru
      _
    %671 = vsyncpa [#allocation4], 1

</llo_original>
